<compile_context>
chip_gen: v7x
topology: tpu7x:2x2x1
jax: 0.10.0
libtpu: 0.0.40
codegen_flags: <defaults>
</compile_context>

<pallas_src>
import jax
import jax.numpy as jnp
from jax.experimental import pallas as pl
from jax.experimental.pallas import tpu as pltpu


def _gnn_kernel(mg_ref, pp_ref, xt_ref, deg_ref, xf_ref, yf_ref, w_ref, b_ref, o_ref):
    """One row tile of the fused forward.

    mg_ref : (2, TM, N_g)  bf16  stacked [mask_g_t ; mask_g_tt] row tile
    pp_ref : (2, TM, N_lg) bf16  stacked [pm ; pd]              row tile
    xt_ref : (TM, F)       f32   x row tile
    deg_ref: (TM, 1)       f32   deg_g row tile
    xf_ref : (N_g, F)      f32   full x   (resident across the grid)
    yf_ref : (N_lg, F)     f32   full y   (resident across the grid)
    w_ref  : (6F, OUT_PAD) f32   concatenated pre-transposed weights
    b_ref  : (1, OUT_PAD)  f32   pre-summed biases (zero padded)
    o_ref  : (TM, OUT_PAD) f32
    """
    tm = xt_ref.shape[0]
    xf = xf_ref[...]
    yf = yf_ref[...]

    # Stacked aggregations: one MXU dot for {mask_g_t, mask_g_tt} @ x and one
    # for {pm, pd} @ y (bf16 0/1 masks upcast exactly to f32).
    mg = mg_ref[...].astype(jnp.float32).reshape(2 * tm, xf.shape[0])
    pp = pp_ref[...].astype(jnp.float32).reshape(2 * tm, yf.shape[0])
    agg_x = jnp.dot(mg, xf, preferred_element_type=jnp.float32)   # (2TM, F)
    agg_y = jnp.dot(pp, yf, preferred_element_type=jnp.float32)   # (2TM, F)
    x1, x2 = agg_x[:tm], agg_x[tm:]
    pm_y, pd_y = agg_y[:tm], agg_y[tm:]

    xt = xt_ref[...]
    # Six Linears fused into a single matmul on the concatenated features.
    z = jnp.concatenate([xt, deg_ref[...] * xt, x1, x2, pm_y, pd_y], axis=-1)
    o_ref[...] = (jnp.dot(z, w_ref[...], preferred_element_type=jnp.float32)
                  + b_ref[...])


def _pick_tile_m(n_g, n_lg):
    # Double-buffered bf16 stacked-mask row slabs must fit a v7x-safe VMEM
    # budget: 2 bufs * 2 stacked * (n_g + n_lg) * 2 B per row.
    budget = 24 << 20
    per_row = 2 * 2 * (n_g + n_lg) * 2
    tm = min(512, max(8, budget // max(per_row, 1)))
    tm -= tm % 8                      # keep sublane-aligned for the stacked reshape
    tm = max(tm, 8)
    return n_g if n_g <= tm else tm


def gnn_module_final(x, y, deg_g, mask_g_t, mask_g_tt, pm, pd, params, *, tile_m=None):
    x = jnp.asarray(x, jnp.float32)
    y = jnp.asarray(y, jnp.float32)
    deg_g = jnp.asarray(deg_g, jnp.float32)
    n_g, in_feats = x.shape
    n_lg = y.shape[0]
    out_feats = params["theta_x"][0].shape[0]
    out_pad = ((out_feats + 127) // 128) * 128     # lane-dense output stores

    if tile_m is None:
        tile_m = _pick_tile_m(n_g, n_lg)

    # N^2-sized 0/1 operands -> bf16 (exact), stacked so each pair is one dot.
    mg = jnp.stack([mask_g_t, mask_g_tt]).astype(jnp.bfloat16)    # (2, N_g, N_g)
    pp = jnp.stack([pm, pd]).astype(jnp.bfloat16)                 # (2, N_g, N_lg)

    # Fuse the six Linears: concat transposed weights (in the Z concat order),
    # pre-sum biases, zero-pad the out dim to the lane-dense width.
    names = ("theta_x", "theta_deg", "theta_0", "theta_1", "theta_y_0", "theta_y_1")
    w_cat = jnp.concatenate(
        [jnp.asarray(params[n][0], jnp.float32).T for n in names], axis=0)  # (6F, out)
    b_sum = sum(jnp.asarray(params[n][1], jnp.float32) for n in names)      # (out,)
    w_cat = jnp.pad(w_cat, ((0, 0), (0, out_pad - out_feats)))
    b_sum = jnp.pad(b_sum, (0, out_pad - out_feats)).reshape(1, out_pad)

    grid = (pl.cdiv(n_g, tile_m),)
    in_specs = [
        pl.BlockSpec((2, tile_m, n_g), lambda i: (0, i, 0)),      # stacked masks (tiled)
        pl.BlockSpec((2, tile_m, n_lg), lambda i: (0, i, 0)),     # stacked pm/pd (tiled)
        pl.BlockSpec((tile_m, in_feats), lambda i: (i, 0)),       # x row tile
        pl.BlockSpec((tile_m, 1), lambda i: (i, 0)),              # deg row tile
        pl.BlockSpec((n_g, in_feats), lambda i: (0, 0)),          # full x   (resident)
        pl.BlockSpec((n_lg, in_feats), lambda i: (0, 0)),         # full y   (resident)
        pl.BlockSpec((6 * in_feats, out_pad), lambda i: (0, 0)),  # fused W  (resident)
        pl.BlockSpec((1, out_pad), lambda i: (0, 0)),             # fused b  (resident)
    ]
    out = pl.pallas_call(
        _gnn_kernel,
        out_shape=jax.ShapeDtypeStruct((n_g, out_pad), jnp.float32),
        grid=grid,
        in_specs=in_specs,
        out_specs=pl.BlockSpec((tile_m, out_pad), lambda i: (i, 0)),
        compiler_params=pltpu.CompilerParams(
            dimension_semantics=("parallel",)),
    )(mg, pp, x, deg_g, x, y, w_cat, b_sum)
    return out[:, :out_feats]


def reference(x, y, deg_g, mask_g_t, mask_g_tt, pm, pd, params):
    def lin(name, z):
        w, b = params[name]
        return z @ w.T + b
    pm_y = pm @ y
    pd_y = pd @ y
    x1 = mask_g_t @ x
    x2 = mask_g_tt @ x
    return (lin("theta_x", x) + lin("theta_deg", deg_g * x)
            + lin("theta_0", x1) + lin("theta_1", x2)
            + lin("theta_y_0", pm_y) + lin("theta_y_1", pd_y))


if __name__ == "__main__":
    # Small synthetic problem consistent with the module: in_feats=8, out_feats=16,
    # radius=2, N_g graph nodes, N_lg line-graph nodes.
    in_feats, out_feats = 8, 16
    n_g, n_lg = 64, 96

    key = jax.random.PRNGKey(0)
    keys = jax.random.split(key, 16)

    x = jax.random.normal(keys[0], (n_g, in_feats), jnp.float32)
    y = jax.random.normal(keys[1], (n_lg, in_feats), jnp.float32)
    deg_g = jax.random.randint(keys[2], (n_g, 1), 1, 5).astype(jnp.float32)
    mask_g_t = (jax.random.uniform(keys[3], (n_g, n_g)) < 0.3).astype(jnp.float32)
    mask_g_tt = (jax.random.uniform(keys[4], (n_g, n_g)) < 0.3).astype(jnp.float32)
    pm = (jax.random.uniform(keys[5], (n_g, n_lg)) < 0.25).astype(jnp.float32)
    pd = (jax.random.uniform(keys[6], (n_g, n_lg)) < 0.25).astype(jnp.float32)

    def make_linear(k, fan_in):
        kw, kb = jax.random.split(k)
        bound = 1.0 / jnp.sqrt(fan_in)
        w = jax.random.uniform(kw, (out_feats, fan_in), jnp.float32, -bound, bound)
        b = jax.random.uniform(kb, (out_feats,), jnp.float32, -bound, bound)
        return w, b

    params = {
        "theta_x":   make_linear(keys[7], in_feats),
        "theta_deg": make_linear(keys[8], in_feats),
        "theta_y_0": make_linear(keys[9], in_feats),
        "theta_y_1": make_linear(keys[10], in_feats),
        "theta_0":   make_linear(keys[11], in_feats),   # theta_list[0]
        "theta_1":   make_linear(keys[12], in_feats),   # theta_list[1]
    }

    # tile_m=16 forces a 4-step grid at this small size to exercise the pipeline.
    out = gnn_module_final(x, y, deg_g, mask_g_t, mask_g_tt, pm, pd, params, tile_m=16)
    out = jax.block_until_ready(out)

    ref = reference(x, y, deg_g, mask_g_t, mask_g_tt, pm, pd, params)
    assert out.shape == (n_g, out_feats)
    assert jnp.allclose(out, ref, atol=1e-4, rtol=1e-4), float(jnp.max(jnp.abs(out - ref)))

    print("KERNEL_OK")
</pallas_src>

<mosaic_0001>
module attributes {stable_mosaic.version = 11 : i64} {
  func.func @_gnn_kernel(%arg0: i32, %arg1: memref<2x16x64xbf16, #tpu.memory_space<vmem>>, %arg2: memref<2x16x96xbf16, #tpu.memory_space<vmem>>, %arg3: memref<16x8xf32, #tpu.memory_space<vmem>>, %arg4: memref<16x1xf32, #tpu.memory_space<vmem>>, %arg5: memref<64x8xf32, #tpu.memory_space<vmem>>, %arg6: memref<96x8xf32, #tpu.memory_space<vmem>>, %arg7: memref<48x128xf32, #tpu.memory_space<vmem>>, %arg8: memref<1x128xf32, #tpu.memory_space<vmem>>, %arg9: memref<16x128xf32, #tpu.memory_space<vmem>>) attributes {dimension_semantics = [#tpu.dimension_semantics<parallel>], iteration_bounds = array<i64: 4>, scalar_prefetch = 0 : i64, scratch_operands = 0 : i64, tpu.core_type = #tpu.core_type<tc>, window_params = [{transform_indices = @transform_0, window_bounds = array<i64: 2, 16, 64>}, {transform_indices = @transform_1, window_bounds = array<i64: 2, 16, 96>}, {transform_indices = @transform_2, window_bounds = array<i64: 16, 8>}, {transform_indices = @transform_3, window_bounds = array<i64: 16, 1>}, {pipeline_mode = #tpu.pipeline_mode<synchronous>, transform_indices = @transform_4, window_bounds = array<i64: 64, 8>}, {pipeline_mode = #tpu.pipeline_mode<synchronous>, transform_indices = @transform_5, window_bounds = array<i64: 96, 8>}, {pipeline_mode = #tpu.pipeline_mode<synchronous>, transform_indices = @transform_6, window_bounds = array<i64: 48, 128>}, {pipeline_mode = #tpu.pipeline_mode<synchronous>, transform_indices = @transform_7, window_bounds = array<i64: 1, 128>}, {transform_indices = @transform_8, window_bounds = array<i64: 16, 128>}]} {
    %c0 = arith.constant 0 : index
    %c0_0 = arith.constant 0 : index
    %0 = vector.load %arg5[%c0, %c0_0] : memref<64x8xf32, #tpu.memory_space<vmem>>, vector<64x8xf32>
    %c0_1 = arith.constant 0 : index
    %c0_2 = arith.constant 0 : index
    %1 = vector.load %arg6[%c0_1, %c0_2] : memref<96x8xf32, #tpu.memory_space<vmem>>, vector<96x8xf32>
    %c0_3 = arith.constant 0 : index
    %c0_4 = arith.constant 0 : index
    %c0_5 = arith.constant 0 : index
    %2 = vector.load %arg1[%c0_3, %c0_4, %c0_5] : memref<2x16x64xbf16, #tpu.memory_space<vmem>>, vector<2x16x64xbf16>
    %3 = arith.extf %2 : vector<2x16x64xbf16> to vector<2x16x64xf32>
    %4 = vector.shape_cast %3 : vector<2x16x64xf32> to vector<32x64xf32>
    %c0_6 = arith.constant 0 : index
    %c0_7 = arith.constant 0 : index
    %c0_8 = arith.constant 0 : index
    %5 = vector.load %arg2[%c0_6, %c0_7, %c0_8] : memref<2x16x96xbf16, #tpu.memory_space<vmem>>, vector<2x16x96xbf16>
    %6 = arith.extf %5 : vector<2x16x96xbf16> to vector<2x16x96xf32>
    %7 = vector.shape_cast %6 : vector<2x16x96xf32> to vector<32x96xf32>
    %cst = arith.constant dense<0.000000e+00> : vector<32x8xf32>
    %8 = tpu.matmul %4, %0, %cst {dimension_numbers = #tpu.dot_dimension_numbers<[1], [0], [0], [1], [0, 0, 1, 1], [], []>} : vector<32x64xf32>, vector<64x8xf32>, vector<32x8xf32> -> vector<32x8xf32>
    %cst_9 = arith.constant dense<0.000000e+00> : vector<32x8xf32>
    %9 = tpu.matmul %7, %1, %cst_9 {dimension_numbers = #tpu.dot_dimension_numbers<[1], [0], [0], [1], [0, 0, 1, 1], [], []>} : vector<32x96xf32>, vector<96x8xf32>, vector<32x8xf32> -> vector<32x8xf32>
    %10 = vector.extract_strided_slice %8 {offsets = [0, 0], sizes = [16, 8], strides = [1, 1]} : vector<32x8xf32> to vector<16x8xf32>
    %11 = vector.extract_strided_slice %8 {offsets = [16, 0], sizes = [16, 8], strides = [1, 1]} : vector<32x8xf32> to vector<16x8xf32>
    %12 = vector.extract_strided_slice %9 {offsets = [0, 0], sizes = [16, 8], strides = [1, 1]} : vector<32x8xf32> to vector<16x8xf32>
    %13 = vector.extract_strided_slice %9 {offsets = [16, 0], sizes = [16, 8], strides = [1, 1]} : vector<32x8xf32> to vector<16x8xf32>
    %c0_10 = arith.constant 0 : index
    %c0_11 = arith.constant 0 : index
    %14 = vector.load %arg3[%c0_10, %c0_11] : memref<16x8xf32, #tpu.memory_space<vmem>>, vector<16x8xf32>
    %c0_12 = arith.constant 0 : index
    %c0_13 = arith.constant 0 : index
    %15 = vector.load %arg4[%c0_12, %c0_13] : memref<16x1xf32, #tpu.memory_space<vmem>>, vector<16x1xf32>
    %16 = vector.broadcast %15 : vector<16x1xf32> to vector<16x8xf32>
    %17 = arith.mulf %16, %14 : vector<16x8xf32>
    %18 = tpu.concatenate %14, %17, %10, %11, %12, %13 in 1 : vector<16x8xf32>, vector<16x8xf32>, vector<16x8xf32>, vector<16x8xf32>, vector<16x8xf32>, vector<16x8xf32> -> vector<16x48xf32>
    %c0_14 = arith.constant 0 : index
    %c0_15 = arith.constant 0 : index
    %19 = vector.load %arg7[%c0_14, %c0_15] : memref<48x128xf32, #tpu.memory_space<vmem>>, vector<48x128xf32>
    %cst_16 = arith.constant dense<0.000000e+00> : vector<16x128xf32>
    %20 = tpu.matmul %18, %19, %cst_16 {dimension_numbers = #tpu.dot_dimension_numbers<[1], [0], [0], [1], [0, 0, 1, 1], [], []>} : vector<16x48xf32>, vector<48x128xf32>, vector<16x128xf32> -> vector<16x128xf32>
    %c0_17 = arith.constant 0 : index
    %c0_18 = arith.constant 0 : index
    %21 = vector.load %arg8[%c0_17, %c0_18] : memref<1x128xf32, #tpu.memory_space<vmem>>, vector<1x128xf32>
    %22 = vector.broadcast %21 : vector<1x128xf32> to vector<16x128xf32>
    %23 = arith.addf %20, %22 : vector<16x128xf32>
    %c0_19 = arith.constant 0 : index
    %c0_20 = arith.constant 0 : index
    %24 = vector.load %arg9[%c0_19, %c0_20] : memref<16x128xf32, #tpu.memory_space<vmem>>, vector<16x128xf32>
    tpu.vector_store %arg9[%c0_19, %c0_20], %23 {strides = array<i32>} : memref<16x128xf32, #tpu.memory_space<vmem>>, vector<16x128xf32>,
    return
  }
  func.func @transform_0(%arg0: i32) -> (i32, i32, i32) {
    %c0_i32 = arith.constant 0 : i32
    %c0_i32_0 = arith.constant 0 : i32
    %c0_i32_1 = arith.constant 0 : i32
    return %c0_i32, %arg0, %c0_i32_0 : i32, i32, i32
  }
  func.func @transform_1(%arg0: i32) -> (i32, i32, i32) {
    %c0_i32 = arith.constant 0 : i32
    %c0_i32_0 = arith.constant 0 : i32
    %c0_i32_1 = arith.constant 0 : i32
    return %c0_i32, %arg0, %c0_i32_0 : i32, i32, i32
  }
  func.func @transform_2(%arg0: i32) -> (i32, i32) {
    %c0_i32 = arith.constant 0 : i32
    %c0_i32_0 = arith.constant 0 : i32
    return %arg0, %c0_i32 : i32, i32
  }
  func.func @transform_3(%arg0: i32) -> (i32, i32) {
    %c0_i32 = arith.constant 0 : i32
    %c0_i32_0 = arith.constant 0 : i32
    return %arg0, %c0_i32 : i32, i32
  }
  func.func @transform_4(%arg0: i32) -> (i32, i32) {
    %c0_i32 = arith.constant 0 : i32
    %c0_i32_0 = arith.constant 0 : i32
    %c0_i32_1 = arith.constant 0 : i32
    return %c0_i32, %c0_i32_0 : i32, i32
  }
  func.func @transform_5(%arg0: i32) -> (i32, i32) {
    %c0_i32 = arith.constant 0 : i32
    %c0_i32_0 = arith.constant 0 : i32
    %c0_i32_1 = arith.constant 0 : i32
    return %c0_i32, %c0_i32_0 : i32, i32
  }
  func.func @transform_6(%arg0: i32) -> (i32, i32) {
    %c0_i32 = arith.constant 0 : i32
    %c0_i32_0 = arith.constant 0 : i32
    %c0_i32_1 = arith.constant 0 : i32
    return %c0_i32, %c0_i32_0 : i32, i32
  }
  func.func @transform_7(%arg0: i32) -> (i32, i32) {
    %c0_i32 = arith.constant 0 : i32
    %c0_i32_0 = arith.constant 0 : i32
    %c0_i32_1 = arith.constant 0 : i32
    return %c0_i32, %c0_i32_0 : i32, i32
  }
  func.func @transform_8(%arg0: i32) -> (i32, i32) {
    %c0_i32 = arith.constant 0 : i32
    %c0_i32_0 = arith.constant 0 : i32
    return %arg0, %c0_i32 : i32, i32
  }
}

</mosaic_0001>

<llo_original>
// kernel: tpu_custom_call.1
$region0: #{tpu_custom_call.1}
  #allocation0 [shape = 'u32[]', space=smem, size = 0x4, offset = 0x4, fixed_abs, tag = 'smem constant byte address 0x4 - core index']
  #allocation1 [shape = 'u32[144,128]{1,0:T(1,128)}', space=vmem, size = 0x12000, scoped, tag = 'internal scratch']
  %s0 = inlined_call_operand.vmem [shape: bf16[2,64,64], index: 0, kind: input, shape index: {}]
  %s1 = inlined_call_operand.vmem [shape: bf16[2,64,96], index: 1, kind: input, shape index: {}]
  %s2 = inlined_call_operand.vmem [shape: f32[64,8], index: 2, kind: input, shape index: {}]
  %s3 = inlined_call_operand.vmem [shape: f32[64,1], index: 3, kind: input, shape index: {}]
  %s4 = inlined_call_operand.vmem [shape: f32[64,8], index: 4, kind: input, shape index: {}]
  %s5 = inlined_call_operand.vmem [shape: f32[96,8], index: 5, kind: input, shape index: {}]
  %s6 = inlined_call_operand.vmem [shape: f32[48,128], index: 6, kind: input, shape index: {}]
  %s7 = inlined_call_operand.vmem [shape: f32[1,128], index: 7, kind: input, shape index: {}]
  %s8 = inlined_call_operand.hbm [shape: f32[64,128], index: 8, kind: output, shape index: {}]
  %s9 = sld [smem:[#allocation0]]
  $region147: #{tpu_custom_call.1} parent=0
    _
  %s11 = ssub.s32 1, %s9
  %s12 = scalar_select 0, %s11, %s9
  $region1: #{tpu_custom_call.1} parent=0
    #allocation2 [shape = 'u8[16384]{0}', space=vmem, size = 0x4000, scoped, tag = 'input window, operand 0']
    #allocation3 [shape = 'u8[16384]{0}', space=vmem, size = 0x4000, scoped, tag = 'input window, operand 1']
    #allocation4 [shape = 'u8[16384]{0}', space=vmem, size = 0x4000, scoped, tag = 'output window, operand 0']
    #allocation5 [shape = 's32[2]{0}', space=sflag, size = 0x8, scoped, tag = 'scoped memory for tpu_custom_call.1']
    %13 = vsyncpa [#allocation5], 0
    %s14 = scalar_lea.sflag [#allocation5], 1
    %15 = vsyncpa %s14, 0
    loop: start=0, step=1, limit=6
    $region2: #{tpu_custom_call.1} parent=1 // loop_pre_header
      _
    $region3: #{tpu_custom_call.1} parent=1 // loop_header
      %s17 = sphi 0, %s21
      %p18 = scmp.ge.s32.totalorder %s17, 6
      %s27 = sphi 0, %s29
      %s30 = sphi 0, %s27
      %s31 = sphi 0, %s30
      %s47 = sphi 0, %s31
      %s53 = sphi 0, %s55
      %s56 = sphi 0, %s53
      %s57 = sphi 0, %s56
      %s73 = sphi 0, %s57
      %s79 = sphi 0, %s81
      %s82 = sphi 0, %s79
      %s83 = sphi 0, %s82
      %s99 = sphi 0, %s83
      %s105 = sphi 0, %s107
      %s108 = sphi 0, %s105
      %s109 = sphi 0, %s108
      %s125 = sphi 0, %s109
      %s129 = sphi 0, %s129
      %s131 = sphi 0, %s129
      %s132 = sphi 0, %s131
      %s146 = sphi 0, %s132
      %s150 = sphi 0, %s150
      %s152 = sphi 0, %s150
      %s153 = sphi 0, %s152
      %s167 = sphi 0, %s153
      %s171 = sphi 0, %s171
      %s173 = sphi 0, %s171
      %s174 = sphi 0, %s173
      %s188 = sphi 0, %s174
      %s192 = sphi 0, %s192
      %s194 = sphi 0, %s192
      %s195 = sphi 0, %s194
      %s209 = sphi 0, %s195
      %s215 = sphi 0, %s217
      %s218 = sphi 0, %s215
      %s219 = sphi 0, %s218
      %s235 = sphi 0, %s219
    $region4: #{tpu_custom_call.1} parent=1 // loop_header_branch
      %20 = sbr.rel (%p18) target = $region8
    $region5: #{tpu_custom_call.1} parent=1 // loop_body
      %s22 = ssub.s32 %s17, 1
      %s23 = ssub.s32 %s17, 2
      %s24 = sadd.s32 %s17, 1
      %s25 = ssub.s32 %s17, %s24
      %p26 = scmp.eq.s32.totalorder %s25, 0
      %s28 = sadd.s32 %s27, 1
      %s29 = scalar_select %p26, %s27, %s28
      %p32 = pneg %p26
      %p33 = scmp.eq.s32.totalorder %s17, 3
      %p34 = por %p32, %p33
      %p35 = scmp.ne.s32.totalorder %s27, %s30
      %p36 = scmp.eq.s32.totalorder %s17, 0
      %p37 = por %p35, %p36
      %p38 = scmp.ne.s32.totalorder %s27, %s30
      %p39 = scmp.eq.s32.totalorder %s22, 3
      %p40 = por %p38, %p39
      %p41 = scmp.ne.s32.totalorder %s30, %s31
      %p42 = scmp.eq.s32.totalorder %s22, 0
      %p43 = por %p41, %p42
      %p44 = scmp.ne.s32.totalorder %s30, %s31
      %p45 = scmp.eq.s32.totalorder %s23, 3
      %p46 = por %p44, %p45
      %p48 = scmp.ne.s32.totalorder %s31, %s47
      %p49 = scmp.eq.s32.totalorder %s23, 0
      %p50 = por %p48, %p49
      %s51 = ssub.s32 %s17, %s24
      %p52 = scmp.eq.s32.totalorder %s51, 0
      %s54 = sadd.s32 %s53, 1
      %s55 = scalar_select %p52, %s53, %s54
      %p58 = pneg %p52
      %p59 = scmp.eq.s32.totalorder %s17, 3
      %p60 = por %p58, %p59
      %p61 = scmp.ne.s32.totalorder %s53, %s56
      %p62 = scmp.eq.s32.totalorder %s17, 0
      %p63 = por %p61, %p62
      %p64 = scmp.ne.s32.totalorder %s53, %s56
      %p65 = scmp.eq.s32.totalorder %s22, 3
      %p66 = por %p64, %p65
      %p67 = scmp.ne.s32.totalorder %s56, %s57
      %p68 = scmp.eq.s32.totalorder %s22, 0
      %p69 = por %p67, %p68
      %p70 = scmp.ne.s32.totalorder %s56, %s57
      %p71 = scmp.eq.s32.totalorder %s23, 3
      %p72 = por %p70, %p71
      %p74 = scmp.ne.s32.totalorder %s57, %s73
      %p75 = scmp.eq.s32.totalorder %s23, 0
      %p76 = por %p74, %p75
      %s77 = ssub.s32 %s17, %s24
      %p78 = scmp.eq.s32.totalorder %s77, 0
      %s80 = sadd.s32 %s79, 1
      %s81 = scalar_select %p78, %s79, %s80
      %p84 = pneg %p78
      %p85 = scmp.eq.s32.totalorder %s17, 3
      %p86 = por %p84, %p85
      %p87 = scmp.ne.s32.totalorder %s79, %s82
      %p88 = scmp.eq.s32.totalorder %s17, 0
      %p89 = por %p87, %p88
      %p90 = scmp.ne.s32.totalorder %s79, %s82
      %p91 = scmp.eq.s32.totalorder %s22, 3
      %p92 = por %p90, %p91
      %p93 = scmp.ne.s32.totalorder %s82, %s83
      %p94 = scmp.eq.s32.totalorder %s22, 0
      %p95 = por %p93, %p94
      %p96 = scmp.ne.s32.totalorder %s82, %s83
      %p97 = scmp.eq.s32.totalorder %s23, 3
      %p98 = por %p96, %p97
      %p100 = scmp.ne.s32.totalorder %s83, %s99
      %p101 = scmp.eq.s32.totalorder %s23, 0
      %p102 = por %p100, %p101
      %s103 = ssub.s32 %s17, %s24
      %p104 = scmp.eq.s32.totalorder %s103, 0
      %s106 = sadd.s32 %s105, 1
      %s107 = scalar_select %p104, %s105, %s106
      %p110 = pneg %p104
      %p111 = scmp.eq.s32.totalorder %s17, 3
      %p112 = por %p110, %p111
      %p113 = scmp.ne.s32.totalorder %s105, %s108
      %p114 = scmp.eq.s32.totalorder %s17, 0
      %p115 = por %p113, %p114
      %p116 = scmp.ne.s32.totalorder %s105, %s108
      %p117 = scmp.eq.s32.totalorder %s22, 3
      %p118 = por %p116, %p117
      %p119 = scmp.ne.s32.totalorder %s108, %s109
      %p120 = scmp.eq.s32.totalorder %s22, 0
      %p121 = por %p119, %p120
      %p122 = scmp.ne.s32.totalorder %s108, %s109
      %p123 = scmp.eq.s32.totalorder %s23, 3
      %p124 = por %p122, %p123
      %p126 = scmp.ne.s32.totalorder %s109, %s125
      %p127 = scmp.eq.s32.totalorder %s23, 0
      %p128 = por %p126, %p127
      %s130 = sadd.s32 %s129, 1
      %p133 = scmp.eq.s32.totalorder %s17, 3
      %p134 = scmp.ne.s32.totalorder %s129, %s131
      %p135 = scmp.eq.s32.totalorder %s17, 0
      %p136 = por %p134, %p135
      %p137 = scmp.ne.s32.totalorder %s129, %s131
      %p138 = scmp.eq.s32.totalorder %s22, 3
      %p139 = por %p137, %p138
      %p140 = scmp.ne.s32.totalorder %s131, %s132
      %p141 = scmp.eq.s32.totalorder %s22, 0
      %p142 = por %p140, %p141
      %p143 = scmp.ne.s32.totalorder %s131, %s132
      %p144 = scmp.eq.s32.totalorder %s23, 3
      %p145 = por %p143, %p144
      %p147 = scmp.ne.s32.totalorder %s132, %s146
      %p148 = scmp.eq.s32.totalorder %s23, 0
      %p149 = por %p147, %p148
      %s151 = sadd.s32 %s150, 1
      %p154 = scmp.eq.s32.totalorder %s17, 3
      %p155 = scmp.ne.s32.totalorder %s150, %s152
      %p156 = scmp.eq.s32.totalorder %s17, 0
      %p157 = por %p155, %p156
      %p158 = scmp.ne.s32.totalorder %s150, %s152
      %p159 = scmp.eq.s32.totalorder %s22, 3
      %p160 = por %p158, %p159
      %p161 = scmp.ne.s32.totalorder %s152, %s153
      %p162 = scmp.eq.s32.totalorder %s22, 0
      %p163 = por %p161, %p162
      %p164 = scmp.ne.s32.totalorder %s152, %s153
      %p165 = scmp.eq.s32.totalorder %s23, 3
      %p166 = por %p164, %p165
      %p168 = scmp.ne.s32.totalorder %s153, %s167
      %p169 = scmp.eq.s32.totalorder %s23, 0
      %p170 = por %p168, %p169
      %s172 = sadd.s32 %s171, 1
      %p175 = scmp.eq.s32.totalorder %s17, 3
      %p176 = scmp.ne.s32.totalorder %s171, %s173
      %p177 = scmp.eq.s32.totalorder %s17, 0
      %p178 = por %p176, %p177
      %p179 = scmp.ne.s32.totalorder %s171, %s173
      %p180 = scmp.eq.s32.totalorder %s22, 3
      %p181 = por %p179, %p180
      %p182 = scmp.ne.s32.totalorder %s173, %s174
      %p183 = scmp.eq.s32.totalorder %s22, 0
      %p184 = por %p182, %p183
      %p185 = scmp.ne.s32.totalorder %s173, %s174
      %p186 = scmp.eq.s32.totalorder %s23, 3
      %p187 = por %p185, %p186
      %p189 = scmp.ne.s32.totalorder %s174, %s188
      %p190 = scmp.eq.s32.totalorder %s23, 0
      %p191 = por %p189, %p190
      %s193 = sadd.s32 %s192, 1
      %p196 = scmp.eq.s32.totalorder %s17, 3
      %p197 = scmp.ne.s32.totalorder %s192, %s194
      %p198 = scmp.eq.s32.totalorder %s17, 0
      %p199 = por %p197, %p198
      %p200 = scmp.ne.s32.totalorder %s192, %s194
      %p201 = scmp.eq.s32.totalorder %s22, 3
      %p202 = por %p200, %p201
      %p203 = scmp.ne.s32.totalorder %s194, %s195
      %p204 = scmp.eq.s32.totalorder %s22, 0
      %p205 = por %p203, %p204
      %p206 = scmp.ne.s32.totalorder %s194, %s195
      %p207 = scmp.eq.s32.totalorder %s23, 3
      %p208 = por %p206, %p207
      %p210 = scmp.ne.s32.totalorder %s195, %s209
      %p211 = scmp.eq.s32.totalorder %s23, 0
      %p212 = por %p210, %p211
      %s213 = ssub.s32 %s17, %s24
      %p214 = scmp.eq.s32.totalorder %s213, 0
      %s216 = sadd.s32 %s215, 1
      %s217 = scalar_select %p214, %s215, %s216
      %p220 = pneg %p214
      %p221 = scmp.eq.s32.totalorder %s17, 3
      %p222 = por %p220, %p221
      %p223 = scmp.ne.s32.totalorder %s215, %s218
      %p224 = scmp.eq.s32.totalorder %s17, 0
      %p225 = por %p223, %p224
      %p226 = scmp.ne.s32.totalorder %s215, %s218
      %p227 = scmp.eq.s32.totalorder %s22, 3
      %p228 = por %p226, %p227
      %p229 = scmp.ne.s32.totalorder %s218, %s219
      %p230 = scmp.eq.s32.totalorder %s22, 0
      %p231 = por %p229, %p230
      %p232 = scmp.ne.s32.totalorder %s218, %s219
      %p233 = scmp.eq.s32.totalorder %s23, 3
      %p234 = por %p232, %p233
      %p236 = scmp.ne.s32.totalorder %s219, %s235
      %p237 = scmp.eq.s32.totalorder %s23, 0
      %p238 = por %p236, %p237
      %p239 = scmp.le.s32.totalorder 1, %s17
      %p240 = scmp.lt.s32.totalorder %s17, 5
      %p241 = pnand %p239, %p240
      %p242 = pneg %p241
      // Predicated region
      $region9: #{tpu_custom_call.1} parent=5 // pred_check
        _
      $region10: #{tpu_custom_call.1} parent=5 // pred_check_branch
        %244 = sbr.rel (%p241) target = $region12
      $region11: #{tpu_custom_call.1} parent=5 // pred_region
        %s245 = ssub.s32 %s17, 1
        // Predicated region
        $region13: #{tpu_custom_call.1} parent=11 // pred_check
          %p246 = pneg %p142
        $region14: #{tpu_custom_call.1} parent=11 // pred_check_branch
          %248 = sbr.rel (%p246) target = $region16
        $region15: #{tpu_custom_call.1} parent=11 // pred_region
          _
        $region16: #{tpu_custom_call.1} parent=11 // pred_fallthru
          _
        // Predicated region
        $region17: #{tpu_custom_call.1} parent=11 // pred_check
          %p249 = pneg %p163
        $region18: #{tpu_custom_call.1} parent=11 // pred_check_branch
          %251 = sbr.rel (%p249) target = $region20
        $region19: #{tpu_custom_call.1} parent=11 // pred_region
          _
        $region20: #{tpu_custom_call.1} parent=11 // pred_fallthru
          _
        // Predicated region
        $region21: #{tpu_custom_call.1} parent=11 // pred_check
          %p252 = pneg %p184
        $region22: #{tpu_custom_call.1} parent=11 // pred_check_branch
          %254 = sbr.rel (%p252) target = $region24
        $region23: #{tpu_custom_call.1} parent=11 // pred_region
          _
        $region24: #{tpu_custom_call.1} parent=11 // pred_fallthru
          _
        // Predicated region
        $region25: #{tpu_custom_call.1} parent=11 // pred_check
          %p255 = pneg %p205
        $region26: #{tpu_custom_call.1} parent=11 // pred_check_branch
          %257 = sbr.rel (%p255) target = $region28
        $region27: #{tpu_custom_call.1} parent=11 // pred_region
          _
        $region28: #{tpu_custom_call.1} parent=11 // pred_fallthru
          _
      $region12: #{tpu_custom_call.1} parent=5 // pred_fallthru
        _
      %p258 = scmp.lt.s32.totalorder %s17, 4
      // Predicated region
      $region29: #{tpu_custom_call.1} parent=5 // pred_check
        %p259 = pneg %p258
      $region30: #{tpu_custom_call.1} parent=5 // pred_check_branch
        %261 = sbr.rel (%p259) target = $region32
      $region31: #{tpu_custom_call.1} parent=5 // pred_region
        // Predicated region
        $region33: #{tpu_custom_call.1} parent=31 // pred_check
          %p262 = pneg %p37
        $region34: #{tpu_custom_call.1} parent=31 // pred_check_branch
          %264 = sbr.rel (%p262) target = $region36
        $region35: #{tpu_custom_call.1} parent=31 // pred_region
          %s265 = sand.u32 %s27, 1
          %s266 = sand.u32 %s27, 1
          %s267 = smul.addr %s266, 16
          %s268 = scalar_lea.vmem [#allocation2], %s267
          %s269 = smul.u32 2, %s17
          %s270 = smul.addr %s269, 4
          %s271 = scalar_lea.vmem %s0, %s270
          // Predicated region
          $region37: #{tpu_custom_call.1} parent=35 // pred_check
            _
          $region38: #{tpu_custom_call.1} parent=35 // pred_check_branch
            %273 = sbr.rel (0) target = $region40
          $region39: #{tpu_custom_call.1} parent=35 // pred_region
            // Predicated region
            $region41: #{tpu_custom_call.1} parent=39 // pred_check
              _
            $region42: #{tpu_custom_call.1} parent=39 // pred_check_branch
              %275 = sbr.rel target = $region44
            $region43: #{tpu_custom_call.1} parent=39 // pred_region
              // Predicated region
              $region56: #{tpu_custom_call.1} parent=43 // pred_check
                _
              $region57: #{tpu_custom_call.1} parent=43 // pred_check_branch
                %296 = sbr.rel (0) target = $region59
              $region58: #{tpu_custom_call.1} parent=43 // pred_region
                loop: start=0, step=1, limit=1
                $region60: #{tpu_custom_call.1} parent=58 // loop_pre_header
                  _
                $region61: #{tpu_custom_call.1} parent=58 // loop_header
                  %s298 = sphi 0, %s302
                  %p299 = scmp.ge.s32.totalorder %s298, 1
                  %s303 = sphi %s271, %s271
                  %s304 = sphi %s268, %s268
                $region62: #{tpu_custom_call.1} parent=58 // loop_header_branch
                  %301 = sbr.rel (%p299) target = $region66
                $region63: #{tpu_custom_call.1} parent=58 // loop_body
                  _
                $region64: #{tpu_custom_call.1} parent=58 // loop_footer
                  %s302 = sadd.s32 1, %s298
                $region65: #{tpu_custom_call.1} parent=58 // loop_footer_branch
                  %297 = sbr.rel target = $region61
                $region66: #{tpu_custom_call.1} parent=58 // loop_exit
                  _
                loop: start=0, step=1, limit=1
                $region67: #{tpu_custom_call.1} parent=58 // loop_pre_header
                  _
                $region68: #{tpu_custom_call.1} parent=58 // loop_header
                  %s307 = sphi 0, %s311
                  %p308 = scmp.ge.s32.totalorder %s307, 1
                  %s312 = sphi %s271, %s271
                  %s313 = sphi %s268, %s268
                $region69: #{tpu_custom_call.1} parent=58 // loop_header_branch
                  %310 = sbr.rel (%p308) target = $region73
                $region70: #{tpu_custom_call.1} parent=58 // loop_body
                  %v314 = vld [vmem:[%s312] sm:$0xf]
                  %315 = vst [vmem:[%s313] sm:$0xf] %v314
                  %v316 = vld [vmem:[%s312 + $0x4] sm:$0xf]
                  %317 = vst [vmem:[%s313 + $0x4] sm:$0xf] %v316
                  %v318 = vld [vmem:[%s312 + $0x20] sm:$0xf]
                  %319 = vst [vmem:[%s313 + $0x8] sm:$0xf] %v318
                  %v320 = vld [vmem:[%s312 + $0x24] sm:$0xf]
                  %321 = vst [vmem:[%s313 + $0xc] sm:$0xf] %v320
                $region71: #{tpu_custom_call.1} parent=58 // loop_footer
                  %s311 = sadd.s32 1, %s307
                $region72: #{tpu_custom_call.1} parent=58 // loop_footer_branch
                  %306 = sbr.rel target = $region68
                $region73: #{tpu_custom_call.1} parent=58 // loop_exit
                  _
              $region59: #{tpu_custom_call.1} parent=43 // pred_fallthru
                _
            $region44: #{tpu_custom_call.1} parent=39 // pred_fallthru
              _
            // Predicated region
            $region45: #{tpu_custom_call.1} parent=39 // pred_check
              _
            $region46: #{tpu_custom_call.1} parent=39 // pred_check_branch
              %277 = sbr.rel (0) target = $region48
            $region47: #{tpu_custom_call.1} parent=39 // pred_region
              loop: start=0, step=1, limit=1
              $region49: #{tpu_custom_call.1} parent=47 // loop_pre_header
                _
              $region50: #{tpu_custom_call.1} parent=47 // loop_header
                %s280 = sphi 0, %s284
                %p281 = scmp.ge.s32.totalorder %s280, 1
                %s285 = sphi %s271, %s271
                %s286 = sphi %s268, %s268
              $region51: #{tpu_custom_call.1} parent=47 // loop_header_branch
                %283 = sbr.rel (%p281) target = $region55
              $region52: #{tpu_custom_call.1} parent=47 // loop_body
                %v287 = vld [vmem:[%s285] sm:$0xf]
                %288 = vst [vmem:[%s286] sm:$0xf] %v287
                %v289 = vld [vmem:[%s285 + $0x4] sm:$0xf]
                %290 = vst [vmem:[%s286 + $0x4] sm:$0xf] %v289
                %v291 = vld [vmem:[%s285 + $0x20] sm:$0xf]
                %292 = vst [vmem:[%s286 + $0x8] sm:$0xf] %v291
                %v293 = vld [vmem:[%s285 + $0x24] sm:$0xf]
                %294 = vst [vmem:[%s286 + $0xc] sm:$0xf] %v293
              $region53: #{tpu_custom_call.1} parent=47 // loop_footer
                %s284 = sadd.s32 1, %s280
              $region54: #{tpu_custom_call.1} parent=47 // loop_footer_branch
                %279 = sbr.rel target = $region50
              $region55: #{tpu_custom_call.1} parent=47 // loop_exit
                _
            $region48: #{tpu_custom_call.1} parent=39 // pred_fallthru
              _
          $region40: #{tpu_custom_call.1} parent=35 // pred_fallthru
            _
          %322 = vnop
        $region36: #{tpu_custom_call.1} parent=31 // pred_fallthru
          _
        // Predicated region
        $region74: #{tpu_custom_call.1} parent=31 // pred_check
          %p323 = pneg %p63
        $region75: #{tpu_custom_call.1} parent=31 // pred_check_branch
          %325 = sbr.rel (%p323) target = $region77
        $region76: #{tpu_custom_call.1} parent=31 // pred_region
          %s326 = sand.u32 %s53, 1
          %s327 = sand.u32 %s53, 1
          %s328 = smul.addr %s327, 16
          %s329 = scalar_lea.vmem [#allocation3], %s328
          %s330 = smul.u32 2, %s17
          %s331 = smul.addr %s330, 4
          %s332 = scalar_lea.vmem %s1, %s331
          // Predicated region
          $region78: #{tpu_custom_call.1} parent=76 // pred_check
            _
          $region79: #{tpu_custom_call.1} parent=76 // pred_check_branch
            %334 = sbr.rel (0) target = $region81
          $region80: #{tpu_custom_call.1} parent=76 // pred_region
            // Predicated region
            $region82: #{tpu_custom_call.1} parent=80 // pred_check
              _
            $region83: #{tpu_custom_call.1} parent=80 // pred_check_branch
              %336 = sbr.rel target = $region85
            $region84: #{tpu_custom_call.1} parent=80 // pred_region
              // Predicated region
              $region97: #{tpu_custom_call.1} parent=84 // pred_check
                _
              $region98: #{tpu_custom_call.1} parent=84 // pred_check_branch
                %357 = sbr.rel (0) target = $region100
              $region99: #{tpu_custom_call.1} parent=84 // pred_region
                loop: start=0, step=1, limit=1
                $region101: #{tpu_custom_call.1} parent=99 // loop_pre_header
                  _
                $region102: #{tpu_custom_call.1} parent=99 // loop_header
                  %s359 = sphi 0, %s363
                  %p360 = scmp.ge.s32.totalorder %s359, 1
                  %s364 = sphi %s332, %s332
                  %s365 = sphi %s329, %s329
                $region103: #{tpu_custom_call.1} parent=99 // loop_header_branch
                  %362 = sbr.rel (%p360) target = $region107
                $region104: #{tpu_custom_call.1} parent=99 // loop_body
                  _
                $region105: #{tpu_custom_call.1} parent=99 // loop_footer
                  %s363 = sadd.s32 1, %s359
                $region106: #{tpu_custom_call.1} parent=99 // loop_footer_branch
                  %358 = sbr.rel target = $region102
                $region107: #{tpu_custom_call.1} parent=99 // loop_exit
                  _
                loop: start=0, step=1, limit=1
                $region108: #{tpu_custom_call.1} parent=99 // loop_pre_header
                  _
                $region109: #{tpu_custom_call.1} parent=99 // loop_header
                  %s368 = sphi 0, %s372
                  %p369 = scmp.ge.s32.totalorder %s368, 1
                  %s373 = sphi %s332, %s332
                  %s374 = sphi %s329, %s329
                $region110: #{tpu_custom_call.1} parent=99 // loop_header_branch
                  %371 = sbr.rel (%p369) target = $region114
                $region111: #{tpu_custom_call.1} parent=99 // loop_body
                  %v375 = vld [vmem:[%s373] sm:$0xf]
                  %376 = vst [vmem:[%s374] sm:$0xf] %v375
                  %v377 = vld [vmem:[%s373 + $0x4] sm:$0xf]
                  %378 = vst [vmem:[%s374 + $0x4] sm:$0xf] %v377
                  %v379 = vld [vmem:[%s373 + $0x20] sm:$0xf]
                  %380 = vst [vmem:[%s374 + $0x8] sm:$0xf] %v379
                  %v381 = vld [vmem:[%s373 + $0x24] sm:$0xf]
                  %382 = vst [vmem:[%s374 + $0xc] sm:$0xf] %v381
                $region112: #{tpu_custom_call.1} parent=99 // loop_footer
                  %s372 = sadd.s32 1, %s368
                $region113: #{tpu_custom_call.1} parent=99 // loop_footer_branch
                  %367 = sbr.rel target = $region109
                $region114: #{tpu_custom_call.1} parent=99 // loop_exit
                  _
              $region100: #{tpu_custom_call.1} parent=84 // pred_fallthru
                _
            $region85: #{tpu_custom_call.1} parent=80 // pred_fallthru
              _
            // Predicated region
            $region86: #{tpu_custom_call.1} parent=80 // pred_check
              _
            $region87: #{tpu_custom_call.1} parent=80 // pred_check_branch
              %338 = sbr.rel (0) target = $region89
            $region88: #{tpu_custom_call.1} parent=80 // pred_region
              loop: start=0, step=1, limit=1
              $region90: #{tpu_custom_call.1} parent=88 // loop_pre_header
                _
              $region91: #{tpu_custom_call.1} parent=88 // loop_header
                %s341 = sphi 0, %s345
                %p342 = scmp.ge.s32.totalorder %s341, 1
                %s346 = sphi %s332, %s332
                %s347 = sphi %s329, %s329
              $region92: #{tpu_custom_call.1} parent=88 // loop_header_branch
                %344 = sbr.rel (%p342) target = $region96
              $region93: #{tpu_custom_call.1} parent=88 // loop_body
                %v348 = vld [vmem:[%s346] sm:$0xf]
                %349 = vst [vmem:[%s347] sm:$0xf] %v348
                %v350 = vld [vmem:[%s346 + $0x4] sm:$0xf]
                %351 = vst [vmem:[%s347 + $0x4] sm:$0xf] %v350
                %v352 = vld [vmem:[%s346 + $0x20] sm:$0xf]
                %353 = vst [vmem:[%s347 + $0x8] sm:$0xf] %v352
                %v354 = vld [vmem:[%s346 + $0x24] sm:$0xf]
                %355 = vst [vmem:[%s347 + $0xc] sm:$0xf] %v354
              $region94: #{tpu_custom_call.1} parent=88 // loop_footer
                %s345 = sadd.s32 1, %s341
              $region95: #{tpu_custom_call.1} parent=88 // loop_footer_branch
                %340 = sbr.rel target = $region91
              $region96: #{tpu_custom_call.1} parent=88 // loop_exit
                _
            $region89: #{tpu_custom_call.1} parent=80 // pred_fallthru
              _
          $region81: #{tpu_custom_call.1} parent=76 // pred_fallthru
            _
          %383 = vnop
        $region77: #{tpu_custom_call.1} parent=31 // pred_fallthru
          _
        // Predicated region
        $region115: #{tpu_custom_call.1} parent=31 // pred_check
          %p384 = pneg %p89
        $region116: #{tpu_custom_call.1} parent=31 // pred_check_branch
          %386 = sbr.rel (%p384) target = $region118
        $region117: #{tpu_custom_call.1} parent=31 // pred_region
          %s387 = smul.u32 2, %s17
          %p388 = scmp.lt.s32.totalorder %s387, 7
          %s389 = scalar_select %p388, %s387, 7
          %s390 = smul.addr %s389, 8
          %s391 = scalar_lea.vmem %s2, %s390
          %s392 = smul.u32 2, %s17
        $region118: #{tpu_custom_call.1} parent=31 // pred_fallthru
          _
        // Predicated region
        $region119: #{tpu_custom_call.1} parent=31 // pred_check
          %p393 = pneg %p115
        $region120: #{tpu_custom_call.1} parent=31 // pred_check_branch
          %395 = sbr.rel (%p393) target = $region122
        $region121: #{tpu_custom_call.1} parent=31 // pred_region
          %s396 = smul.u32 2, %s17
          %p397 = scmp.lt.s32.totalorder %s396, 7
          %s398 = scalar_select %p397, %s396, 7
          %s399 = smul.addr %s398, 8
          %s400 = scalar_lea.vmem %s3, %s399
          %s401 = smul.u32 2, %s17
        $region122: #{tpu_custom_call.1} parent=31 // pred_fallthru
          _
      $region32: #{tpu_custom_call.1} parent=5 // pred_fallthru
        _
      %p402 = scmp.le.s32.totalorder 1, %s17
      %p403 = scmp.lt.s32.totalorder %s17, 5
      %p404 = pnand %p402, %p403
      %p405 = pneg %p404
      // Predicated region
      $region123: #{tpu_custom_call.1} parent=5 // pred_check
        _
      $region124: #{tpu_custom_call.1} parent=5 // pred_check_branch
        %407 = sbr.rel (%p404) target = $region126
      $region125: #{tpu_custom_call.1} parent=5 // pred_region
        %s408 = ssub.s32 %s17, 1
        %s409 = sand.u32 %s30, 1
        %s410 = sand.u32 %s30, 1
        %s411 = smul.addr %s410, 16
        %s412 = scalar_lea.vmem [#allocation2], %s411
        // Predicated region
        $region127: #{tpu_custom_call.1} parent=125 // pred_check
          %p413 = pneg %p43
        $region128: #{tpu_custom_call.1} parent=125 // pred_check_branch
          %415 = sbr.rel (%p413) target = $region130
        $region129: #{tpu_custom_call.1} parent=125 // pred_region
          _
        $region130: #{tpu_custom_call.1} parent=125 // pred_fallthru
          _
        %s416 = sand.u32 %s56, 1
        %s417 = sand.u32 %s56, 1
        %s418 = smul.addr %s417, 16
        %s419 = scalar_lea.vmem [#allocation3], %s418
        // Predicated region
        $region131: #{tpu_custom_call.1} parent=125 // pred_check
          %p420 = pneg %p69
        $region132: #{tpu_custom_call.1} parent=125 // pred_check_branch
          %422 = sbr.rel (%p420) target = $region134
        $region133: #{tpu_custom_call.1} parent=125 // pred_region
          _
        $region134: #{tpu_custom_call.1} parent=125 // pred_fallthru
          _
        %s423 = sand.u32 %s30, 1
        %s424 = sand.u32 %s30, 1
        %s425 = smul.addr %s424, 16
        %s426 = scalar_lea.vmem [#allocation2], %s425
        %p427 = pneg %p43
        %p428 = pneg %p40
        %s429 = sand.u32 %s56, 1
        %s430 = sand.u32 %s56, 1
        %s431 = smul.addr %s430, 16
        %s432 = scalar_lea.vmem [#allocation3], %s431
        %p433 = pneg %p69
        %p434 = pneg %p66
        %s435 = smul.u32 2, %s22
        %p436 = scmp.lt.s32.totalorder %s435, 7
        %s437 = scalar_select %p436, %s435, 7
        %s438 = smul.addr %s437, 8
        %s439 = scalar_lea.vmem %s2, %s438
        %p440 = pneg %p95
        %p441 = pneg %p92
        %s442 = smul.u32 2, %s22
        %p443 = scmp.lt.s32.totalorder %s442, 7
        %s444 = scalar_select %p443, %s442, 7
        %s445 = smul.addr %s444, 8
        %s446 = scalar_lea.vmem %s3, %s445
        %p447 = pneg %p121
        %p448 = pneg %p118
        %p449 = pneg %p142
        %p450 = pneg %p139
        %p451 = pneg %p163
        %p452 = pneg %p160
        %p453 = pneg %p184
        %p454 = pneg %p181
        %p455 = pneg %p205
        %p456 = pneg %p202
        %p457 = pneg %p231
        %p458 = pneg %p228
        %s459 = sand.u32 %s218, 1
        %s460 = scalar_lea.sflag [#allocation5], %s459
        %s461 = sand.u32 %s218, 1
        %s462 = smul.addr %s461, 16
        %s463 = scalar_lea.vmem [#allocation4], %s462
        %s464 = smul.u32 2, %s22
        %s465 = smul.u32 2, %s22
        %s466 = smul.u32 2, %s22
        %p467 = scmp.lt.s32.totalorder %s466, 7
        %s468 = scalar_select %p467, %s466, 7
        %s469 = smul.addr %s468, 8
        %s470 = scalar_lea.vmem %s2, %s469
        %s471 = smul.u32 2, %s22
        %s472 = smul.u32 2, %s22
        %p473 = scmp.lt.s32.totalorder %s472, 7
        %s474 = scalar_select %p473, %s472, 7
        %s475 = smul.addr %s474, 8
        %s476 = scalar_lea.vmem %s3, %s475
        %s477 = smul.u32 2, %s22
        %s478 = smul.u32 2, %s22
        %v479 = vld [vmem:[%s4] sm:$0xff]
        %v480 = vld [vmem:[%s4 + $0x8] sm:$0xff]
        %v481 = vld [vmem:[%s4 + $0x10] sm:$0xff]
        %v482 = vld [vmem:[%s4 + $0x18] sm:$0xff]
        %v483 = vld [vmem:[%s4 + $0x20] sm:$0xff]
        %v484 = vld [vmem:[%s4 + $0x28] sm:$0xff]
        %v485 = vld [vmem:[%s4 + $0x30] sm:$0xff]
        %v486 = vld [vmem:[%s4 + $0x38] sm:$0xff]
        %v487 = vld [vmem:[%s5] sm:$0xff]
        %v488 = vld [vmem:[%s5 + $0x8] sm:$0xff]
        %v489 = vld [vmem:[%s5 + $0x10] sm:$0xff]
        %v490 = vld [vmem:[%s5 + $0x18] sm:$0xff]
        %v491 = vld [vmem:[%s5 + $0x20] sm:$0xff]
        %v492 = vld [vmem:[%s5 + $0x28] sm:$0xff]
        %v493 = vld [vmem:[%s5 + $0x30] sm:$0xff]
        %v494 = vld [vmem:[%s5 + $0x38] sm:$0xff]
        %v495 = vld [vmem:[%s5 + $0x40] sm:$0xff]
        %v496 = vld [vmem:[%s5 + $0x48] sm:$0xff]
        %v497 = vld [vmem:[%s5 + $0x50] sm:$0xff]
        %v498 = vld [vmem:[%s5 + $0x58] sm:$0xff]
        %v499 = vld [vmem:[%s412] sm:$0xf]
        %v500 = vld [vmem:[%s412 + $0x4] sm:$0xf]
        %v501 = vld [vmem:[%s412 + $0x8] sm:$0xf]
        %v502 = vld [vmem:[%s412 + $0xc] sm:$0xf]
        %v503 = vunpack.c.l.bf16 %v499
        %v504 = vunpack.c.l.bf16 %v500
        %v505 = vunpack.c.l.bf16 %v501
        %v506 = vunpack.c.l.bf16 %v502
        %v507 = vld [vmem:[%s419] sm:$0xf]
        %v508 = vld [vmem:[%s419 + $0x4] sm:$0xf]
        %v509 = vld [vmem:[%s419 + $0x8] sm:$0xf]
        %v510 = vld [vmem:[%s419 + $0xc] sm:$0xf]
        %v511 = vunpack.c.l.bf16 %v507
        %v512 = vunpack.c.l.bf16 %v508
        %v513 = vunpack.c.l.bf16 %v509
        %v514 = vunpack.c.l.bf16 %v510
        %vm515 = vcmask 523264
        %v517 = vsel %vm515, %v503, 0
        %v520 = vsel %vm515, %v504, 0
        %v523 = vsel %vm515, %v505, 0
        %v526 = vsel %vm515, %v506, 0
        %528 = vmatprep.subr.mxu0 0.0
        %529 = vmatpush1.msra.mxu0 %v479
        %530 = vmatprep.subr.mxu0 0.0
        %531 = vmatpush1.msra.mxu0 %v480
        %532 = vmatprep.subr.mxu0 0.0
        %533 = vmatpush1.msra.mxu0 %v481
        %534 = vmatprep.subr.mxu0 0.0
        %535 = vmatpush1.msra.mxu0 %v482
        %536 = vmatprep.subr.mxu0 0.0
        %537 = vmatpush1.msra.mxu0 %v483
        %538 = vmatprep.subr.mxu0 0.0
        %539 = vmatpush1.msra.mxu0 %v484
        %540 = vmatprep.subr.mxu0 0.0
        %541 = vmatpush1.msra.mxu0 %v485
        %542 = vmatprep.subr.mxu0 0.0
        %543 = vmatpush1.msra.mxu0 %v486
        %544 = vmatprep.subr.mxu0 0.0
        %545 = vmatpush1.msra.mxu0 0.0
        %546 = vmatprep.subr.mxu0 0.0
        %547 = vmatpush1.msra.mxu0 0.0
        %548 = vmatprep.subr.mxu0 0.0
        %549 = vmatpush1.msra.mxu0 0.0
        %550 = vmatprep.subr.mxu0 0.0
        %551 = vmatpush1.msra.mxu0 0.0
        %552 = vmatprep.subr.mxu0 0.0
        %553 = vmatpush1.msra.mxu0 0.0
        %554 = vmatprep.subr.mxu0 0.0
        %555 = vmatpush1.msra.mxu0 0.0
        %556 = vmatprep.subr.mxu0 0.0
        %557 = vmatpush1.msra.mxu0 0.0
        %558 = vmatprep.subr.mxu0 0.0
        %559 = vmatpush1.msra.mxu0 0.0
        %560 = vmatprep.subr.mxu0 0.0
        %561 = vmatpush1.msra.mxu0 0.0
        %562 = vmatprep.subr.mxu0 0.0
        %563 = vmatpush1.msra.mxu0 0.0
        %564 = vmatprep.subr.mxu0 0.0
        %565 = vmatpush1.msra.mxu0 0.0
        %566 = vmatprep.subr.mxu0 0.0
        %567 = vmatpush1.msra.mxu0 0.0
        %568 = vmatprep.subr.mxu0 0.0
        %569 = vmatpush1.msra.mxu0 0.0
        %570 = vmatprep.subr.mxu0 0.0
        %571 = vmatpush1.msra.mxu0 0.0
        %572 = vmatprep.subr.mxu0 0.0
        %573 = vmatpush1.msra.mxu0 0.0
        %574 = vmatprep.subr.mxu0 0.0
        %575 = vmatpush1.msra.mxu0 0.0
        %576 = vmatprep.subr.mxu0 0.0
        %577 = vmatpush1.msra.mxu0 0.0
        %578 = vmatprep.subr.mxu0 0.0
        %579 = vmatpush1.msra.mxu0 0.0
        %580 = vmatprep.subr.mxu0 0.0
        %581 = vmatpush1.msra.mxu0 0.0
        %582 = vmatprep.subr.mxu0 0.0
        %583 = vmatpush1.msra.mxu0 0.0
        %584 = vmatprep.subr.mxu0 0.0
        %585 = vmatpush1.msra.mxu0 0.0
        %586 = vmatprep.subr.mxu0 0.0
        %587 = vmatpush1.msra.mxu0 0.0
        %588 = vmatprep.subr.mxu0 0.0
        %589 = vmatpush1.msra.mxu0 0.0
        %590 = vmatprep.subr.mxu0 0.0
        %591 = vmatpush1.msra.mxu0 0.0
        %592 = vmatprep.mubr.f32.mxu0 0.0
        %593 = vmatmul.mubr.f32.gmra.mrb[0].mxu0 %v517
        %v594 = vpop.f32.mrb[0].mxu0
        %v595 = vadd.f32 0.0, %v594
        %v596 = vpop.f32.mrb[0].mxu0
        %597 = vmatprep.mubr.f32.mxu0 0.0
        %598 = vmatmul.mubr.f32.gmra.mrb[0].mxu0 %v520
        %v599 = vpop.f32.mrb[0].mxu0
        %v600 = vadd.f32 0.0, %v599
        %v601 = vpop.f32.mrb[0].mxu0
        %602 = vmatprep.mubr.f32.mxu0 0.0
        %603 = vmatmul.mubr.f32.gmra.mrb[0].mxu0 %v523
        %v604 = vpop.f32.mrb[0].mxu0
        %v605 = vadd.f32 0.0, %v604
        %v606 = vpop.f32.mrb[0].mxu0
        %607 = vmatprep.mubr.f32.mxu0 0.0
        %608 = vmatmul.mubr.f32.gmra.mrb[0].mxu0 %v526
        %v609 = vpop.f32.mrb[0].mxu0
        %v610 = vadd.f32 0.0, %v609
        %v611 = vpop.f32.mrb[0].mxu0
        %612 = vdwg.mxu0
        %vm613 = vcmask 785408
        %v615 = vsel %vm613, %v511, 0
        %v618 = vsel %vm613, %v512, 0
        %v621 = vsel %vm613, %v513, 0
        %v624 = vsel %vm613, %v514, 0
        %626 = vmatprep.subr.mxu0 0.0
        %627 = vmatpush1.msra.mxu0 %v487
        %628 = vmatprep.subr.mxu0 0.0
        %629 = vmatpush1.msra.mxu0 %v488
        %630 = vmatprep.subr.mxu0 0.0
        %631 = vmatpush1.msra.mxu0 %v489
        %632 = vmatprep.subr.mxu0 0.0
        %633 = vmatpush1.msra.mxu0 %v490
        %634 = vmatprep.subr.mxu0 0.0
        %635 = vmatpush1.msra.mxu0 %v491
        %636 = vmatprep.subr.mxu0 0.0
        %637 = vmatpush1.msra.mxu0 %v492
        %638 = vmatprep.subr.mxu0 0.0
        %639 = vmatpush1.msra.mxu0 %v493
        %640 = vmatprep.subr.mxu0 0.0
        %641 = vmatpush1.msra.mxu0 %v494
        %642 = vmatprep.subr.mxu0 0.0
        %643 = vmatpush1.msra.mxu0 %v495
        %644 = vmatprep.subr.mxu0 0.0
        %645 = vmatpush1.msra.mxu0 %v496
        %646 = vmatprep.subr.mxu0 0.0
        %647 = vmatpush1.msra.mxu0 %v497
        %648 = vmatprep.subr.mxu0 0.0
        %649 = vmatpush1.msra.mxu0 %v498
        %650 = vmatprep.subr.mxu0 0.0
        %651 = vmatpush1.msra.mxu0 0.0
        %652 = vmatprep.subr.mxu0 0.0
        %653 = vmatpush1.msra.mxu0 0.0
        %654 = vmatprep.subr.mxu0 0.0
        %655 = vmatpush1.msra.mxu0 0.0
        %656 = vmatprep.subr.mxu0 0.0
        %657 = vmatpush1.msra.mxu0 0.0
        %658 = vmatprep.subr.mxu0 0.0
        %659 = vmatpush1.msra.mxu0 0.0
        %660 = vmatprep.subr.mxu0 0.0
        %661 = vmatpush1.msra.mxu0 0.0
        %662 = vmatprep.subr.mxu0 0.0
        %663 = vmatpush1.msra.mxu0 0.0
        %664 = vmatprep.subr.mxu0 0.0
        %665 = vmatpush1.msra.mxu0 0.0
        %666 = vmatprep.subr.mxu0 0.0
        %667 = vmatpush1.msra.mxu0 0.0
        %668 = vmatprep.subr.mxu0 0.0
        %669 = vmatpush1.msra.mxu0 0.0
        %670 = vmatprep.subr.mxu0 0.0
        %671 = vmatpush1.msra.mxu0 0.0
        %672 = vmatprep.subr.mxu0 0.0
        %673 = vmatpush1.msra.mxu0 0.0
        %674 = vmatprep.subr.mxu0 0.0
        %675 = vmatpush1.msra.mxu0 0.0
        %676 = vmatprep.subr.mxu0 0.0
        %677 = vmatpush1.msra.mxu0 0.0
        %678 = vmatprep.subr.mxu0 0.0
        %679 = vmatpush1.msra.mxu0 0.0
        %680 = vmatprep.subr.mxu0 0.0
        %681 = vmatpush1.msra.mxu0 0.0
        %682 = vmatprep.subr.mxu0 0.0
        %683 = vmatpush1.msra.mxu0 0.0
        %684 = vmatprep.subr.mxu0 0.0
        %685 = vmatpush1.msra.mxu0 0.0
        %686 = vmatprep.subr.mxu0 0.0
        %687 = vmatpush1.msra.mxu0 0.0
        %688 = vmatprep.subr.mxu0 0.0
        %689 = vmatpush1.msra.mxu0 0.0
        %690 = vmatprep.mubr.f32.mxu0 0.0
        %691 = vmatmul.mubr.f32.gmra.mrb[0].mxu0 %v615
        %v692 = vpop.f32.mrb[0].mxu0
        %v693 = vadd.f32 0.0, %v692
        %v694 = vpop.f32.mrb[0].mxu0
        %695 = vmatprep.mubr.f32.mxu0 0.0
        %696 = vmatmul.mubr.f32.gmra.mrb[0].mxu0 %v618
        %v697 = vpop.f32.mrb[0].mxu0
        %v698 = vadd.f32 0.0, %v697
        %v699 = vpop.f32.mrb[0].mxu0
        %700 = vmatprep.mubr.f32.mxu0 0.0
        %701 = vmatmul.mubr.f32.gmra.mrb[0].mxu0 %v621
        %v702 = vpop.f32.mrb[0].mxu0
        %v703 = vadd.f32 0.0, %v702
        %v704 = vpop.f32.mrb[0].mxu0
        %705 = vmatprep.mubr.f32.mxu0 0.0
        %706 = vmatmul.mubr.f32.gmra.mrb[0].mxu0 %v624
        %v707 = vpop.f32.mrb[0].mxu0
        %v708 = vadd.f32 0.0, %v707
        %v709 = vpop.f32.mrb[0].mxu0
        %710 = vdwg.mxu0
        %v711 = vld [vmem:[%s470] sm:$0xff]
        %v712 = vld [vmem:[%s470 + $0x8] sm:$0xff]
        %v713 = vld [vmem:[%s476] sm:$0xff]
        %v714 = vld [vmem:[%s476 + $0x8] sm:$0xff]
        %716 = vset.pattern.permute.xlu0 0
        %717 = vperm.xlu0 %716, %v713
        %v718 = vpop.permute.xlu0 %717
        %721 = vset.pattern.permute.xlu0 0
        %722 = vperm.xlu0 %721, %v714
        %v723 = vpop.permute.xlu0 %722
        %v725 = vmul.f32 %v718, %v711
        %v726 = vmul.f32 %v723, %v712
        %729 = vrot.lane.b32.xlu0 %v725, 8
        %v730 = vpop.permute.xlu0 %729
        %731 = vrot.lane.b32.xlu0 %v726, 8
        %v732 = vpop.permute.xlu0 %731
        %737 = vrot.lane.b32.xlu0 %v595, 16
        %v738 = vpop.permute.xlu0 %737
        %739 = vrot.lane.b32.xlu0 %v600, 16
        %v740 = vpop.permute.xlu0 %739
        %745 = vrot.lane.b32.xlu0 %v605, 24
        %v746 = vpop.permute.xlu0 %745
        %747 = vrot.lane.b32.xlu0 %v610, 24
        %v748 = vpop.permute.xlu0 %747
        %753 = vrot.lane.b32.xlu0 %v693, 32
        %v754 = vpop.permute.xlu0 %753
        %755 = vrot.lane.b32.xlu0 %v698, 32
        %v756 = vpop.permute.xlu0 %755
        %761 = vrot.lane.b32.xlu0 %v703, 40
        %v762 = vpop.permute.xlu0 %761
        %763 = vrot.lane.b32.xlu0 %v708, 40
        %v764 = vpop.permute.xlu0 %763
        %vm767 = vcmask 64512
        %v768 = vsel %vm767, %v711, %v730
        %v769 = vsel %vm767, %v712, %v732
        %vm770 = vcmask 130048
        %v771 = vsel %vm770, %v768, %v738
        %v772 = vsel %vm770, %v769, %v740
        %vm773 = vcmask 195584
        %v774 = vsel %vm773, %v771, %v746
        %v775 = vsel %vm773, %v772, %v748
        %vm776 = vcmask 261120
        %v777 = vsel %vm776, %v774, %v754
        %v778 = vsel %vm776, %v775, %v756
        %vm779 = vcmask 326656
        %v780 = vsel %vm779, %v777, %v762
        %v781 = vsel %vm779, %v778, %v764
        %v782 = vld [vmem:[%s6] sm:$0xff]
        %v783 = vld [vmem:[%s6 + $0x8] sm:$0xff]
        %v784 = vld [vmem:[%s6 + $0x10] sm:$0xff]
        %v785 = vld [vmem:[%s6 + $0x18] sm:$0xff]
        %v786 = vld [vmem:[%s6 + $0x20] sm:$0xff]
        %v787 = vld [vmem:[%s6 + $0x28] sm:$0xff]
        %v788 = vld [vmem:[%s7] sm:$0x1]
        %v790 = vlaneseq
        %v791 = vshrl.u32 %v790, 7
        %v792 = vsub.s32 0, %v791
        %v793 = vrot.slane %v788, %v792
        %vm795 = vcmask 392192
        %v797 = vsel %vm795, %v780, 0
        %v800 = vsel %vm795, %v781, 0
        %802 = vmatprep.subr.mxu0 0.0
        %803 = vmatpush1.msra.mxu0 %v782
        %804 = vmatprep.subr.mxu0 0.0
        %805 = vmatpush1.msra.mxu0 %v783
        %806 = vmatprep.subr.mxu0 0.0
        %807 = vmatpush1.msra.mxu0 %v784
        %808 = vmatprep.subr.mxu0 0.0
        %809 = vmatpush1.msra.mxu0 %v785
        %810 = vmatprep.subr.mxu0 0.0
        %811 = vmatpush1.msra.mxu0 %v786
        %812 = vmatprep.subr.mxu0 0.0
        %813 = vmatpush1.msra.mxu0 %v787
        %814 = vmatprep.subr.mxu0 0.0
        %815 = vmatpush1.msra.mxu0 0.0
        %816 = vmatprep.subr.mxu0 0.0
        %817 = vmatpush1.msra.mxu0 0.0
        %818 = vmatprep.subr.mxu0 0.0
        %819 = vmatpush1.msra.mxu0 0.0
        %820 = vmatprep.subr.mxu0 0.0
        %821 = vmatpush1.msra.mxu0 0.0
        %822 = vmatprep.subr.mxu0 0.0
        %823 = vmatpush1.msra.mxu0 0.0
        %824 = vmatprep.subr.mxu0 0.0
        %825 = vmatpush1.msra.mxu0 0.0
        %826 = vmatprep.subr.mxu0 0.0
        %827 = vmatpush1.msra.mxu0 0.0
        %828 = vmatprep.subr.mxu0 0.0
        %829 = vmatpush1.msra.mxu0 0.0
        %830 = vmatprep.subr.mxu0 0.0
        %831 = vmatpush1.msra.mxu0 0.0
        %832 = vmatprep.subr.mxu0 0.0
        %833 = vmatpush1.msra.mxu0 0.0
        %834 = vmatprep.subr.mxu0 0.0
        %835 = vmatpush1.msra.mxu0 0.0
        %836 = vmatprep.subr.mxu0 0.0
        %837 = vmatpush1.msra.mxu0 0.0
        %838 = vmatprep.subr.mxu0 0.0
        %839 = vmatpush1.msra.mxu0 0.0
        %840 = vmatprep.subr.mxu0 0.0
        %841 = vmatpush1.msra.mxu0 0.0
        %842 = vmatprep.subr.mxu0 0.0
        %843 = vmatpush1.msra.mxu0 0.0
        %844 = vmatprep.subr.mxu0 0.0
        %845 = vmatpush1.msra.mxu0 0.0
        %846 = vmatprep.subr.mxu0 0.0
        %847 = vmatpush1.msra.mxu0 0.0
        %848 = vmatprep.subr.mxu0 0.0
        %849 = vmatpush1.msra.mxu0 0.0
        %850 = vmatprep.subr.mxu0 0.0
        %851 = vmatpush1.msra.mxu0 0.0
        %852 = vmatprep.subr.mxu0 0.0
        %853 = vmatpush1.msra.mxu0 0.0
        %854 = vmatprep.subr.mxu0 0.0
        %855 = vmatpush1.msra.mxu0 0.0
        %856 = vmatprep.subr.mxu0 0.0
        %857 = vmatpush1.msra.mxu0 0.0
        %858 = vmatprep.subr.mxu0 0.0
        %859 = vmatpush1.msra.mxu0 0.0
        %860 = vmatprep.subr.mxu0 0.0
        %861 = vmatpush1.msra.mxu0 0.0
        %862 = vmatprep.subr.mxu0 0.0
        %863 = vmatpush1.msra.mxu0 0.0
        %864 = vmatprep.subr.mxu0 0.0
        %865 = vmatpush1.msra.mxu0 0.0
        %866 = vmatprep.mubr.f32.mxu0 0.0
        %867 = vmatmul.mubr.f32.gmra.mrb[0].mxu0 %v797
        %v868 = vpop.f32.mrb[0].mxu0
        %v869 = vadd.f32 %v793, %v868
        %v870 = vpop.f32.mrb[0].mxu0
        %871 = vmatprep.mubr.f32.mxu0 0.0
        %872 = vmatmul.mubr.f32.gmra.mrb[0].mxu0 %v800
        %v873 = vpop.f32.mrb[0].mxu0
        %v874 = vadd.f32 %v793, %v873
        %v875 = vpop.f32.mrb[0].mxu0
        %876 = vdwg.mxu0
        %877 = vst [vmem:[%s463] sm:$0xff] %v869
        %878 = vst [vmem:[%s463 + $0x8] sm:$0xff] %v874
        %s879 = sand.u32 %s218, 1
        %s880 = scalar_lea.sflag [#allocation5], %s879
        %s881 = sand.u32 %s218, 1
        %s882 = smul.addr %s881, 16
        %s883 = scalar_lea.vmem [#allocation4], %s882
        // Predicated region
        $region135: #{tpu_custom_call.1} parent=125 // pred_check
          %p884 = pneg %p228
        $region136: #{tpu_custom_call.1} parent=125 // pred_check_branch
          %886 = sbr.rel (%p884) target = $region138
        $region137: #{tpu_custom_call.1} parent=125 // pred_region
          %s887 = smul.u32 2, %s22
          %s889 = ssub.s32 256, 256
          %890 = vsyncadd %s880, %s889
          %s891 = smul.addr %s887, 128
          %s892 = scalar_lea.hbm %s8, %s891
          %s893 = sshll.u32 %s883, 4
          %s894 = int_to_ptr.vmem [resolvable:$true] %s893
          %899 = dma.vmem_to_hbm [thread:$0]  %s894, 256, %s892, %s880, 128, 128, 8
        $region138: #{tpu_custom_call.1} parent=125 // pred_fallthru
          _
      $region126: #{tpu_custom_call.1} parent=5 // pred_fallthru
        _
      %p900 = scmp.le.s32.totalorder 2, %s17
      // Predicated region
      $region139: #{tpu_custom_call.1} parent=5 // pred_check
        %p901 = pneg %p900
      $region140: #{tpu_custom_call.1} parent=5 // pred_check_branch
        %903 = sbr.rel (%p901) target = $region142
      $region141: #{tpu_custom_call.1} parent=5 // pred_region
        %s904 = ssub.s32 %s17, 2
        // Predicated region
        $region143: #{tpu_custom_call.1} parent=141 // pred_check
          %p905 = pneg %p234
        $region144: #{tpu_custom_call.1} parent=141 // pred_check_branch
          %907 = sbr.rel (%p905) target = $region146
        $region145: #{tpu_custom_call.1} parent=141 // pred_region
          %s908 = sand.u32 %s219, 1
          %s909 = scalar_lea.sflag [#allocation5], %s908
          %s910 = sand.u32 %s219, 1
          %s911 = smul.addr %s910, 16
          %s912 = scalar_lea.vmem [#allocation4], %s911
          %913 = dma.done %s909, 256
        $region146: #{tpu_custom_call.1} parent=141 // pred_fallthru
          _
      $region142: #{tpu_custom_call.1} parent=5 // pred_fallthru
        _
    $region6: #{tpu_custom_call.1} parent=1 // loop_footer
      %s21 = sadd.s32 1, %s17
    $region7: #{tpu_custom_call.1} parent=1 // loop_footer_branch
      %16 = sbr.rel target = $region3
    $region8: #{tpu_custom_call.1} parent=1 // loop_exit
      _
    %914 = vsyncpa [#allocation5], 1
    %s915 = scalar_lea.sflag [#allocation5], 1
    %916 = vsyncpa %s915, 1

</llo_original>
